<compile_context>
chip_gen: v7x
topology: tpu7x:2x2x1
jax: 0.10.0
libtpu: 0.0.40
codegen_flags: <defaults>
</compile_context>

<pallas_src>
import jax
import jax.numpy as jnp
from jax.experimental import pallas as pl
from jax.experimental.pallas import tpu as pltpu

_ROW_TILE = 4096       # time steps per grid step (large-T path)
_NO_GRID_MAX = 4096    # below this, run a single grid-less invocation


def _forward_kernel(x_ref, w_ref, b_ref, o_ref):
    # x_ref : (tT, n_vis)   VMEM   (any float dtype; upcast here)
    # w_ref : (n_hid, n_vis) VMEM  (nn.Linear layout, f32)
    # b_ref : (1, n_hid)    VMEM   (f32)
    # o_ref : (tT, n_hid)   VMEM   (unpadded, f32)
    x = x_ref[...].astype(jnp.float32)
    # Contract x's n_vis axis against W's n_vis axis -> (tT, n_hid); avoids a
    # separate transpose of the weight anywhere.
    y = jax.lax.dot_general(
        x, w_ref[...],
        dimension_numbers=(((1,), (1,)), ((), ())),
        preferred_element_type=jnp.float32)
    y = y + b_ref[...]
    # sigmoid(y) = 1/(1+exp(-y)); exp goes to the EUP.  approx=False keeps the
    # exact divide so the 1e-5 tolerance vs the reference holds.
    o_ref[...] = pl.reciprocal(1.0 + jnp.exp(-y), approx=False).astype(o_ref.dtype)


def prepare_params(weight: jax.Array, bias: jax.Array):
    """One-time parameter prep (hoisted out of the per-call path)."""
    w = weight.astype(jnp.float32)                      # (n_hid, n_vis)
    b2 = bias.astype(jnp.float32).reshape(1, -1)        # (1, n_hid)
    return w, b2


@jax.jit
def forward_pallas(convolved_vis_spikes: jax.Array,
                   weight_f32: jax.Array,
                   bias_2d: jax.Array) -> jax.Array:
    """sigmoid(x @ W.T + b) as a Pallas TPU kernel.

    Args:
      convolved_vis_spikes: (T, n_vis_neurons) float (any float dtype)
      weight_f32:           (n_hid_neurons, n_vis_neurons) f32 (nn.Linear layout)
      bias_2d:              (1, n_hid_neurons) f32
    Returns:
      (T, n_hid_neurons) float32
    """
    x = convolved_vis_spikes
    T, n_vis = x.shape
    n_hid = weight_f32.shape[0]
    out_shape = jax.ShapeDtypeStruct((T, n_hid), jnp.float32)

    if T <= _NO_GRID_MAX:
        # Single invocation, no grid: no per-step pipeline/DMA overhead and no
        # post-kernel slicing.  Everything fits easily in VMEM.
        return pl.pallas_call(
            _forward_kernel,
            out_shape=out_shape,
            in_specs=[
                pl.BlockSpec(memory_space=pltpu.MemorySpace.VMEM),
                pl.BlockSpec(memory_space=pltpu.MemorySpace.VMEM),
                pl.BlockSpec(memory_space=pltpu.MemorySpace.VMEM),
            ],
            out_specs=pl.BlockSpec(memory_space=pltpu.MemorySpace.VMEM),
        )(x, weight_f32, bias_2d)

    # Large-T path: stream time in big row tiles; W / bias stay resident via
    # constant index maps.  cdiv grid -> Pallas masks the ragged last block's
    # store, so no wrapper-side pad or slice passes over HBM.
    grid = (pl.cdiv(T, _ROW_TILE),)
    return pl.pallas_call(
        _forward_kernel,
        out_shape=out_shape,
        grid=grid,
        in_specs=[
            pl.BlockSpec((_ROW_TILE, n_vis), lambda i: (i, 0)),
            pl.BlockSpec((n_hid, n_vis), lambda i: (0, 0)),
            pl.BlockSpec((1, n_hid), lambda i: (0, 0)),
        ],
        out_specs=pl.BlockSpec((_ROW_TILE, n_hid), lambda i: (i, 0)),
        compiler_params=pltpu.CompilerParams(
            # Independent time tiles -> shard across the 2 TCs on v7x.
            dimension_semantics=("parallel",)),
    )(x, weight_f32, bias_2d)


def forward_ref(x, weight, bias):
    return jax.nn.sigmoid(x.astype(jnp.float32) @ weight.T + bias)


if __name__ == "__main__":
    # Module-consistent small shapes:
    #   n_neurons = 12, n_vis_neurons = 8 -> n_hid_neurons = 4, T = 16
    n_vis = 8
    n_hid = 4
    T = 16

    key = jax.random.PRNGKey(0)
    kx, kw, kb, kx2 = jax.random.split(key, 4)

    convolved_vis_spikes = jax.random.normal(kx, (T, n_vis), dtype=jnp.float32)
    # Deterministic synthetic parameters (nn.Linear(n_vis, n_hid) layout).
    weight = 0.1 * jax.random.normal(kw, (n_hid, n_vis), dtype=jnp.float32)
    bias = 0.1 * jax.random.normal(kb, (n_hid,), dtype=jnp.float32)

    w_f32, b_2d = prepare_params(weight, bias)   # hoisted, done once

    # Small-T (no-grid) path.
    out = jax.block_until_ready(forward_pallas(convolved_vis_spikes, w_f32, b_2d))
    ref = forward_ref(convolved_vis_spikes, weight, bias)
    assert out.shape == (T, n_hid)
    assert jnp.allclose(out, ref, atol=1e-5, rtol=1e-5)

    # Large-T (tiled, parallel-over-time) path with T not a multiple of the
    # row tile, exercising the ragged-last-block masking and a multi-step grid.
    T2 = 10000
    x2 = jax.random.normal(kx2, (T2, n_vis), dtype=jnp.float32)
    out2 = jax.block_until_ready(forward_pallas(x2, w_f32, b_2d))
    ref2 = forward_ref(x2, weight, bias)
    assert out2.shape == (T2, n_hid)
    assert jnp.allclose(out2, ref2, atol=1e-5, rtol=1e-5)

    # TODO(synk): sample_and_log_likelihood (Poisson sampling + basis
    # convolution) is stochastic and outside the forward() hot path; not
    # implemented as a Pallas kernel here.
    print("KERNEL_OK")
</pallas_src>

<mosaic_0001>
module attributes {stable_mosaic.version = 11 : i64} {
  func.func @_forward_kernel(%arg0: memref<16x8xf32, #tpu.memory_space<vmem>>, %arg1: memref<4x8xf32, #tpu.memory_space<vmem>>, %arg2: memref<1x4xf32, #tpu.memory_space<vmem>>, %arg3: memref<16x4xf32, #tpu.memory_space<vmem>>) attributes {dimension_semantics = [], scalar_prefetch = 0 : i64, scratch_operands = 0 : i64, tpu.core_type = #tpu.core_type<tc>} {
    %c0 = arith.constant 0 : index
    %c0_0 = arith.constant 0 : index
    %0 = vector.load %arg0[%c0, %c0_0] : memref<16x8xf32, #tpu.memory_space<vmem>>, vector<16x8xf32>
    %c0_1 = arith.constant 0 : index
    %c0_2 = arith.constant 0 : index
    %1 = vector.load %arg1[%c0_1, %c0_2] : memref<4x8xf32, #tpu.memory_space<vmem>>, vector<4x8xf32>
    %cst = arith.constant dense<0.000000e+00> : vector<16x4xf32>
    %2 = tpu.matmul %0, %1, %cst {dimension_numbers = #tpu.dot_dimension_numbers<[1], [1], [0], [0], [0, 0, 1, 0], [], []>} : vector<16x8xf32>, vector<4x8xf32>, vector<16x4xf32> -> vector<16x4xf32>
    %c0_3 = arith.constant 0 : index
    %c0_4 = arith.constant 0 : index
    %3 = vector.load %arg2[%c0_3, %c0_4] : memref<1x4xf32, #tpu.memory_space<vmem>>, vector<1x4xf32>
    %4 = vector.broadcast %3 : vector<1x4xf32> to vector<16x4xf32>
    %5 = arith.addf %2, %4 : vector<16x4xf32>
    %cst_5 = arith.constant 0.000000e+00 : f32
    %6 = vector.broadcast %cst_5 : f32 to vector<16x4xf32>
    %7 = arith.subf %6, %5 : vector<16x4xf32>
    %8 = math.exp %7 : vector<16x4xf32>
    %cst_6 = arith.constant 1.000000e+00 : f32
    %9 = vector.broadcast %cst_6 : f32 to vector<16x4xf32>
    %10 = arith.addf %9, %8 : vector<16x4xf32>
    %11 = tpu.reciprocal %10 : vector<16x4xf32> -> vector<16x4xf32>
    %c0_7 = arith.constant 0 : index
    %c0_8 = arith.constant 0 : index
    %12 = vector.load %arg3[%c0_7, %c0_8] : memref<16x4xf32, #tpu.memory_space<vmem>>, vector<16x4xf32>
    tpu.vector_store %arg3[%c0_7, %c0_8], %11 {strides = array<i32>} : memref<16x4xf32, #tpu.memory_space<vmem>>, vector<16x4xf32>,
    return
  }
}

</mosaic_0001>

<llo_original>
// kernel: forward_pallas.1
$region0: #{forward_pallas.1}
  #allocation0 [shape = 'u32[]', space=smem, size = 0x4, offset = 0x4, fixed_abs, tag = 'smem constant byte address 0x4 - core index']
  #allocation1 [shape = 'u32[144,128]{1,0:T(1,128)}', space=vmem, size = 0x12000, scoped, tag = 'internal scratch']
  %s0 = inlined_call_operand.vmem [shape: f32[16,8], index: 0, kind: input, shape index: {}]
  %s1 = inlined_call_operand.vmem [shape: f32[4,8], index: 1, kind: input, shape index: {}]
  %s2 = inlined_call_operand.vmem [shape: f32[1,4], index: 2, kind: input, shape index: {}]
  %s3 = inlined_call_operand.vmem [shape: f32[16,4], index: 3, kind: output, shape index: {}]
  %s4 = sld [smem:[#allocation0]]
  $region22: #{forward_pallas.1} parent=0
    _
  %s6 = ssub.s32 1, %s4
  %s7 = scalar_select 0, %s6, %s4
  // Predicated region
  $region2: #{forward_pallas.1} parent=0 // pred_check
    _
  $region3: #{forward_pallas.1} parent=0 // pred_check_branch
    %9 = sbr.rel (0) target = $region5
  $region4: #{forward_pallas.1} parent=0 // pred_region
    _
  $region5: #{forward_pallas.1} parent=0 // pred_fallthru
    _
  // Predicated region
  $region6: #{forward_pallas.1} parent=0 // pred_check
    _
  $region7: #{forward_pallas.1} parent=0 // pred_check_branch
    %11 = sbr.rel (0) target = $region9
  $region8: #{forward_pallas.1} parent=0 // pred_region
    _
  $region9: #{forward_pallas.1} parent=0 // pred_fallthru
    _
  // Predicated region
  $region10: #{forward_pallas.1} parent=0 // pred_check
    _
  $region11: #{forward_pallas.1} parent=0 // pred_check_branch
    %13 = sbr.rel (0) target = $region13
  $region12: #{forward_pallas.1} parent=0 // pred_region
    _
  $region13: #{forward_pallas.1} parent=0 // pred_fallthru
    _
  %v14 = vld [vmem:[%s0] sm:$0xff]
  %v15 = vld [vmem:[%s0 + $0x8] sm:$0xff]
  %v16 = vld [vmem:[%s1] sm:$0xf]
  %v17 = vld [vmem:[%s2] sm:$0x1]
  %v19 = vlaneseq
  %v20 = vshrl.u32 %v19, 7
  %v21 = vsub.s32 0, %v20
  %v22 = vrot.slane %v17, %v21
  %vm24 = vcmask 64512
  %v26 = vsel %vm24, %v14, 0
  %v29 = vsel %vm24, %v15, 0
  %v32 = vsel %vm24, %v16, 0
  %34 = vmatprep.subr.mxu0 0.0
  %35 = vmatpush1.xpose.msra.mxu0 %v32
  %36 = vmatprep.subr.mxu0 0.0
  %37 = vmatpush1.xpose.msra.mxu0 0.0
  %38 = vmatprep.subr.mxu0 0.0
  %39 = vmatpush1.xpose.msra.mxu0 0.0
  %40 = vmatprep.subr.mxu0 0.0
  %41 = vmatpush1.xpose.msra.mxu0 0.0
  %42 = vmatprep.subr.mxu0 0.0
  %43 = vmatpush1.xpose.msra.mxu0 0.0
  %44 = vmatprep.subr.mxu0 0.0
  %45 = vmatpush1.xpose.msra.mxu0 0.0
  %46 = vmatprep.subr.mxu0 0.0
  %47 = vmatpush1.xpose.msra.mxu0 0.0
  %48 = vmatprep.subr.mxu0 0.0
  %49 = vmatpush1.xpose.msra.mxu0 0.0
  %50 = vmatprep.subr.mxu0 0.0
  %51 = vmatpush1.xpose.msra.mxu0 0.0
  %52 = vmatprep.subr.mxu0 0.0
  %53 = vmatpush1.xpose.msra.mxu0 0.0
  %54 = vmatprep.subr.mxu0 0.0
  %55 = vmatpush1.xpose.msra.mxu0 0.0
  %56 = vmatprep.subr.mxu0 0.0
  %57 = vmatpush1.xpose.msra.mxu0 0.0
  %58 = vmatprep.subr.mxu0 0.0
  %59 = vmatpush1.xpose.msra.mxu0 0.0
  %60 = vmatprep.subr.mxu0 0.0
  %61 = vmatpush1.xpose.msra.mxu0 0.0
  %62 = vmatprep.subr.mxu0 0.0
  %63 = vmatpush1.xpose.msra.mxu0 0.0
  %64 = vmatprep.subr.mxu0 0.0
  %65 = vmatpush1.xpose.msra.mxu0 0.0
  %66 = vmatprep.subr.mxu0 0.0
  %67 = vmatpush1.xpose.msra.mxu0 0.0
  %68 = vmatprep.subr.mxu0 0.0
  %69 = vmatpush1.xpose.msra.mxu0 0.0
  %70 = vmatprep.subr.mxu0 0.0
  %71 = vmatpush1.xpose.msra.mxu0 0.0
  %72 = vmatprep.subr.mxu0 0.0
  %73 = vmatpush1.xpose.msra.mxu0 0.0
  %74 = vmatprep.subr.mxu0 0.0
  %75 = vmatpush1.xpose.msra.mxu0 0.0
  %76 = vmatprep.subr.mxu0 0.0
  %77 = vmatpush1.xpose.msra.mxu0 0.0
  %78 = vmatprep.subr.mxu0 0.0
  %79 = vmatpush1.xpose.msra.mxu0 0.0
  %80 = vmatprep.subr.mxu0 0.0
  %81 = vmatpush1.xpose.msra.mxu0 0.0
  %82 = vmatprep.subr.mxu0 0.0
  %83 = vmatpush1.xpose.msra.mxu0 0.0
  %84 = vmatprep.subr.mxu0 0.0
  %85 = vmatpush1.xpose.msra.mxu0 0.0
  %86 = vmatprep.subr.mxu0 0.0
  %87 = vmatpush1.xpose.msra.mxu0 0.0
  %88 = vmatprep.subr.mxu0 0.0
  %89 = vmatpush1.xpose.msra.mxu0 0.0
  %90 = vmatprep.subr.mxu0 0.0
  %91 = vmatpush1.xpose.msra.mxu0 0.0
  %92 = vmatprep.subr.mxu0 0.0
  %93 = vmatpush1.xpose.msra.mxu0 0.0
  %94 = vmatprep.subr.mxu0 0.0
  %95 = vmatpush1.xpose.msra.mxu0 0.0
  %96 = vmatprep.subr.mxu0 0.0
  %97 = vmatpush1.xpose.msra.mxu0 0.0
  %98 = vmatprep.mubr.f32.mxu0 0.0
  %99 = vmatmul.mubr.f32.gmra.mrb[0].mxu0 %v26
  %v100 = vpop.f32.mrb[0].mxu0
  %v101 = vadd.f32 %v22, %v100
  %v102 = vpop.f32.mrb[0].mxu0
  %103 = vmatprep.mubr.f32.mxu0 0.0
  %104 = vmatmul.mubr.f32.gmra.mrb[0].mxu0 %v29
  %v105 = vpop.f32.mrb[0].mxu0
  %v106 = vadd.f32 %v22, %v105
  %v107 = vpop.f32.mrb[0].mxu0
  %108 = vdwg.mxu0
  %v109 = vsub.f32 0.0, %v101
  %v110 = vsub.f32 0.0, %v106
  %v111 = vmul.f32 %v109, 1.442695
  %v112 = vpow.pop %v111
  %v113 = vmul.f32 %v110, 1.442695
  %v114 = vpow.pop %v113
  %v115 = vadd.f32 %v112, 1.0
  %v116 = vadd.f32 %v114, 1.0
  %v117 = vrcp.pop %v115
  %v118 = vrcp.pop %v116
  %vm119 = vcmask 31744
  %120 = vst.msk [vmem:[%s3] sm:$0xff] %vm119, %v117
  %121 = vst.msk [vmem:[%s3 + $0x8] sm:$0xff] %vm119, %v118
  // Predicated region
  $region14: #{forward_pallas.1} parent=0 // pred_check
    _
  $region15: #{forward_pallas.1} parent=0 // pred_check_branch
    %123 = sbr.rel (0) target = $region17
  $region16: #{forward_pallas.1} parent=0 // pred_region
    _
  $region17: #{forward_pallas.1} parent=0 // pred_fallthru
    _
  // Predicated region
  $region18: #{forward_pallas.1} parent=0 // pred_check
    _
  $region19: #{forward_pallas.1} parent=0 // pred_check_branch
    %125 = sbr.rel (0) target = $region21
  $region20: #{forward_pallas.1} parent=0 // pred_region
    _
  $region21: #{forward_pallas.1} parent=0 // pred_fallthru
    _

</llo_original>
